<compile_context>
chip_gen: v6e
topology: v6e:2x2x1
jax: 0.10.0
libtpu: 0.0.40
codegen_flags: <defaults>
</compile_context>

<pallas_src>
import jax
import jax.numpy as jnp
from jax.experimental import pallas as pl
from jax.experimental.pallas import tpu as pltpu


def _round_up(n, m):
    return ((n + m - 1) // m) * m


def context_gating_kernel(xg_ref, xb_ref, w_ref, b_ref, o_ref):
    # xg_ref: (tb, td) f32   gate operand (column tile of x, kept f32 for the VPU)
    # xb_ref: (tb, D)  bf16  matmul rows (pre-cast once in the wrapper)
    # w_ref : (D, td)  bf16  weight column slab (VMEM-resident over inner row axis)
    # b_ref : (1, td)  f32   bias slab
    # o_ref : (tb, td) f32
    logits = jnp.dot(xb_ref[...], w_ref[...],
                     preferred_element_type=jnp.float32) + b_ref[...]
    # sigmoid in f32 (EUP), elementwise gate on the VPU, unmasked lane-dense store.
    o_ref[...] = xg_ref[...] * jax.nn.sigmoid(logits)


def context_gating(x, w, b, *, tb=None, td=None):
    """ContextGating.forward:  glu(cat([x, fc(x)], dim=1), dim=1) == x * sigmoid(x @ w.T + b)

    x: (B, D); w: (D, D) in torch nn.Linear layout (out_features, in_features);
    b: (D,).  Returns (B, D) float32.
    """
    B, D = x.shape
    assert w.shape == (D, D) and b.shape == (D,)

    # ---- tile geometry --------------------------------------------------
    Dp = _round_up(D, 128)                        # lane-aligned feature dim
    if td is None:
        td = min(256, Dp)
    td = min(td, Dp)
    assert td % 128 == 0 and Dp % td == 0

    if tb is None:
        tb = min(256, _round_up(B, 8))            # fill MXU rows when B allows
    tb = _round_up(min(tb, _round_up(B, 8)), 8)
    Bp = _round_up(B, tb)

    # ---- operand prep (once per call, outside the grid loop) ------------
    xf = x.astype(jnp.float32)
    if (Bp, Dp) != (B, D):
        xf = jnp.pad(xf, ((0, Bp - B), (0, Dp - D)))
    x_gate = xf                                   # f32 gate operand
    x_mm = xf.astype(jnp.bfloat16)                # bf16 matmul operand (cast once)

    wt = w.T.astype(jnp.bfloat16)                 # (in, out) so kernel does plain x @ W
    if Dp != D:
        wt = jnp.pad(wt, ((0, Dp - D), (0, Dp - D)))
    bias = b.astype(jnp.float32).reshape(1, D)
    if Dp != D:
        bias = jnp.pad(bias, ((0, 0), (0, Dp - D)))

    # ---- VMEM budget (double-buffered working set) + explicit limit -----
    est = 2 * (tb * Dp * 2 + Dp * td * 2 + 2 * tb * td * 4 + td * 4)
    vmem_limit = int(min(64 * 1024 * 1024, max(32 * 1024 * 1024, 2 * est)))

    # Column axis OUTER, row axis INNER: the (Dp, td) weight slab index map is
    # constant over the inner row axis, so W streams from HBM only ~once.
    grid = (Dp // td, Bp // tb)

    out = pl.pallas_call(
        context_gating_kernel,
        out_shape=jax.ShapeDtypeStruct((Bp, Dp), jnp.float32),
        grid_spec=pltpu.PrefetchScalarGridSpec(
            num_scalar_prefetch=0,
            grid=grid,
            in_specs=[
                pl.BlockSpec((tb, td), lambda j, i: (i, j)),   # f32 gate tile
                pl.BlockSpec((tb, Dp), lambda j, i: (i, 0)),   # bf16 matmul rows
                pl.BlockSpec((Dp, td), lambda j, i: (0, j)),   # weight slab (resident over i)
                pl.BlockSpec((1, td), lambda j, i: (0, j)),    # bias slab
            ],
            out_specs=pl.BlockSpec((tb, td), lambda j, i: (i, j)),
        ),
        compiler_params=pltpu.CompilerParams(
            dimension_semantics=("parallel", "parallel"),
            vmem_limit_bytes=vmem_limit,
        ),
    )(x_gate, x_mm, wt, bias)

    if (Bp, Dp) != (B, D):
        out = out[:B, :D]
    return out


def reference(x, w, b):
    """Pure-JAX f32 replica of ContextGating.forward (torch nn.Linear convention)."""
    x1 = x @ w.T + b
    return x * jax.nn.sigmoid(x1)


if __name__ == "__main__":
    B, D = 16, 256                      # small demo shapes consistent with the module
    key = jax.random.PRNGKey(0)
    kx, kw, kb = jax.random.split(key, 3)
    x = jax.random.normal(kx, (B, D), jnp.float32)
    # nn.Linear(dimension, dimension) weight in torch layout (out_features, in_features)
    w = jax.random.normal(kw, (D, D), jnp.float32) * (D ** -0.5)
    b = 0.1 * jax.random.normal(kb, (D,), jnp.float32)

    out = context_gating(x, w, b)
    out = jax.block_until_ready(out)

    ref = reference(x, w, b)
    assert out.shape == (B, D)
    err = float(jnp.max(jnp.abs(out - ref)))
    # tolerance covers bf16 matmul operands (accumulation is f32, gate is f32)
    assert jnp.allclose(out, ref, atol=3e-2, rtol=3e-2), err

    print("KERNEL_OK")
</pallas_src>

<mosaic_0001>
module attributes {stable_mosaic.version = 11 : i64} {
  func.func @context_gating_kernel(%arg0: i32, %arg1: i32, %arg2: memref<16x256xf32, #tpu.memory_space<vmem>>, %arg3: memref<16x256xbf16, #tpu.memory_space<vmem>>, %arg4: memref<256x256xbf16, #tpu.memory_space<vmem>>, %arg5: memref<1x256xf32, #tpu.memory_space<vmem>>, %arg6: memref<16x256xf32, #tpu.memory_space<vmem>>) attributes {dimension_semantics = [#tpu.dimension_semantics<parallel>, #tpu.dimension_semantics<parallel>], iteration_bounds = array<i64: 1, 1>, scalar_prefetch = 0 : i64, scratch_operands = 0 : i64, tpu.core_type = #tpu.core_type<tc>, window_params = [{transform_indices = @transform_0, window_bounds = array<i64: 16, 256>}, {transform_indices = @transform_1, window_bounds = array<i64: 16, 256>}, {transform_indices = @transform_2, window_bounds = array<i64: 256, 256>}, {transform_indices = @transform_3, window_bounds = array<i64: 1, 256>}, {transform_indices = @transform_4, window_bounds = array<i64: 16, 256>}]} {
    %c0 = arith.constant 0 : index
    %c0_0 = arith.constant 0 : index
    %0 = vector.load %arg3[%c0, %c0_0] : memref<16x256xbf16, #tpu.memory_space<vmem>>, vector<16x256xbf16>
    %c0_1 = arith.constant 0 : index
    %c0_2 = arith.constant 0 : index
    %1 = vector.load %arg4[%c0_1, %c0_2] : memref<256x256xbf16, #tpu.memory_space<vmem>>, vector<256x256xbf16>
    %cst = arith.constant dense<0.000000e+00> : vector<16x256xf32>
    %2 = tpu.matmul %0, %1, %cst {dimension_numbers = #tpu.dot_dimension_numbers<[1], [0], [0], [1], [0, 0, 1, 1], [], []>} : vector<16x256xbf16>, vector<256x256xbf16>, vector<16x256xf32> -> vector<16x256xf32>
    %c0_3 = arith.constant 0 : index
    %c0_4 = arith.constant 0 : index
    %3 = vector.load %arg5[%c0_3, %c0_4] : memref<1x256xf32, #tpu.memory_space<vmem>>, vector<1x256xf32>
    %4 = vector.broadcast %3 : vector<1x256xf32> to vector<16x256xf32>
    %5 = arith.addf %2, %4 : vector<16x256xf32>
    %c0_5 = arith.constant 0 : index
    %c0_6 = arith.constant 0 : index
    %6 = vector.load %arg2[%c0_5, %c0_6] : memref<16x256xf32, #tpu.memory_space<vmem>>, vector<16x256xf32>
    %7 = arith.negf %5 : vector<16x256xf32>
    %8 = math.exp %7 : vector<16x256xf32>
    %cst_7 = arith.constant 1.000000e+00 : f32
    %9 = vector.broadcast %cst_7 : f32 to vector<16x256xf32>
    %10 = arith.addf %9, %8 : vector<16x256xf32>
    %11 = arith.divf %9, %10 : vector<16x256xf32>
    %12 = arith.mulf %6, %11 : vector<16x256xf32>
    %c0_8 = arith.constant 0 : index
    %c0_9 = arith.constant 0 : index
    %13 = vector.load %arg6[%c0_8, %c0_9] : memref<16x256xf32, #tpu.memory_space<vmem>>, vector<16x256xf32>
    tpu.vector_store %arg6[%c0_8, %c0_9], %12 {strides = array<i32>} : memref<16x256xf32, #tpu.memory_space<vmem>>, vector<16x256xf32>,
    return
  }
  func.func @transform_0(%arg0: i32, %arg1: i32) -> (i32, i32) {
    %c0_i32 = arith.constant 0 : i32
    return %arg1, %arg0 : i32, i32
  }
  func.func @transform_1(%arg0: i32, %arg1: i32) -> (i32, i32) {
    %c0_i32 = arith.constant 0 : i32
    %c0_i32_0 = arith.constant 0 : i32
    return %arg1, %c0_i32 : i32, i32
  }
  func.func @transform_2(%arg0: i32, %arg1: i32) -> (i32, i32) {
    %c0_i32 = arith.constant 0 : i32
    %c0_i32_0 = arith.constant 0 : i32
    return %c0_i32, %arg0 : i32, i32
  }
  func.func @transform_3(%arg0: i32, %arg1: i32) -> (i32, i32) {
    %c0_i32 = arith.constant 0 : i32
    %c0_i32_0 = arith.constant 0 : i32
    return %c0_i32, %arg0 : i32, i32
  }
  func.func @transform_4(%arg0: i32, %arg1: i32) -> (i32, i32) {
    %c0_i32 = arith.constant 0 : i32
    return %arg1, %arg0 : i32, i32
  }
}

</mosaic_0001>

<llo_original>
// kernel: tpu_custom_call.1
$region0: #{tpu_custom_call.1}
  #allocation0 [shape = 'u32[]', space=smem, size = 0x4, offset = 0x4, fixed_abs, tag = 'smem constant byte address 0x4 - core index']
  #allocation1 [shape = 'u32[144,128]{1,0:T(1,128)}', space=vmem, size = 0x12000, scoped, tag = 'internal scratch']
  %s0 = inlined_call_operand.hbm [shape: f32[16,256], index: 0, kind: input, shape index: {}]
  %s1 = inlined_call_operand.hbm [shape: bf16[16,256], index: 1, kind: input, shape index: {}]
  %s2 = inlined_call_operand.hbm [shape: bf16[256,256], index: 2, kind: input, shape index: {}]
  %s3 = inlined_call_operand.vmem [shape: f32[1,256], index: 3, kind: input, shape index: {}]
  %s4 = inlined_call_operand.hbm [shape: f32[16,256], index: 4, kind: output, shape index: {}]
  %s5 = sld [smem:[#allocation0]]
  $region38: #{tpu_custom_call.1} parent=0
    _
  %s7 = ssub.s32 1, %s5
  %s8 = scalar_select 0, %s7, %s5
  $region1: #{tpu_custom_call.1} parent=0
    #allocation2 [shape = 'u8[16384]{0}', space=vmem, size = 0x4000, scoped, tag = 'input window, operand 0, single buffered']
    #allocation3 [shape = 's32[1]{0}', space=sflag, size = 0x4, scoped, tag = 'scoped memory for tpu_custom_call.1']
    #allocation4 [shape = 's32[1]{0}', space=sflag, size = 0x4, scoped, tag = 'scoped memory for tpu_custom_call.1']
    #allocation5 [shape = 'u8[8192]{0}', space=vmem, size = 0x2000, scoped, tag = 'input window, operand 1, single buffered']
    #allocation6 [shape = 's32[1]{0}', space=sflag, size = 0x4, scoped, tag = 'scoped memory for tpu_custom_call.1']
    #allocation7 [shape = 'u8[131072]{0}', space=vmem, size = 0x20000, scoped, tag = 'input window, operand 2, single buffered']
    #allocation8 [shape = 'u8[16384]{0}', space=vmem, size = 0x4000, scoped, tag = 'output window, operand 0, single buffered']
    %9 = vsyncpa [#allocation3], 0
    %10 = vsyncpa [#allocation6], 0
    %11 = vsyncpa [#allocation4], 0
    // Predicated region
    $region2: #{tpu_custom_call.1} parent=1 // pred_check
      _
    $region3: #{tpu_custom_call.1} parent=1 // pred_check_branch
      %13 = sbr.rel (0) target = $region5
    $region4: #{tpu_custom_call.1} parent=1 // pred_region
      %s15 = ssub.s32 512, 512
      %16 = vsyncadd [#allocation3], %s15
      %s17 = sshll.u32 [#allocation2], 4
      %s18 = int_to_ptr.vmem [resolvable:$true] %s17
      %23 = dma.hbm_to_vmem [thread:$0]  %s0, 512, %s18, [#allocation3], 256, 256, 16
    $region5: #{tpu_custom_call.1} parent=1 // pred_fallthru
      _
    // Predicated region
    $region6: #{tpu_custom_call.1} parent=1 // pred_check
      _
    $region7: #{tpu_custom_call.1} parent=1 // pred_check_branch
      %25 = sbr.rel (0) target = $region9
    $region8: #{tpu_custom_call.1} parent=1 // pred_region
      %s27 = ssub.s32 256, 256
      %28 = vsyncadd [#allocation6], %s27
      %s29 = sshll.u32 [#allocation5], 4
      %s30 = int_to_ptr.vmem [resolvable:$true] %s29
      %35 = dma.hbm_to_vmem [thread:$0]  %s1, 256, %s30, [#allocation6], 128, 128, 8
    $region9: #{tpu_custom_call.1} parent=1 // pred_fallthru
      _
    // Predicated region
    $region10: #{tpu_custom_call.1} parent=1 // pred_check
      _
    $region11: #{tpu_custom_call.1} parent=1 // pred_check_branch
      %37 = sbr.rel (0) target = $region13
    $region12: #{tpu_custom_call.1} parent=1 // pred_region
      %s39 = ssub.s32 4096, 4096
      %40 = vsyncadd [#allocation6], %s39
      %s41 = sshll.u32 [#allocation7], 4
      %s42 = int_to_ptr.vmem [resolvable:$true] %s41
      %47 = dma.hbm_to_vmem [thread:$0]  %s2, 4096, %s42, [#allocation6], 128, 128, 8
    $region13: #{tpu_custom_call.1} parent=1 // pred_fallthru
      _
    // Predicated region
    $region14: #{tpu_custom_call.1} parent=1 // pred_check
      _
    $region15: #{tpu_custom_call.1} parent=1 // pred_check_branch
      %49 = sbr.rel (0) target = $region17
    $region16: #{tpu_custom_call.1} parent=1 // pred_region
      _
    $region17: #{tpu_custom_call.1} parent=1 // pred_fallthru
      _
    // Predicated region
    $region18: #{tpu_custom_call.1} parent=1 // pred_check
      _
    $region19: #{tpu_custom_call.1} parent=1 // pred_check_branch
      %51 = sbr.rel (0) target = $region21
    $region20: #{tpu_custom_call.1} parent=1 // pred_region
      %52 = dma.done [#allocation3], 512
    $region21: #{tpu_custom_call.1} parent=1 // pred_fallthru
      _
    // Predicated region
    $region22: #{tpu_custom_call.1} parent=1 // pred_check
      _
    $region23: #{tpu_custom_call.1} parent=1 // pred_check_branch
      %54 = sbr.rel (0) target = $region25
    $region24: #{tpu_custom_call.1} parent=1 // pred_region
      %55 = dma.done [#allocation6], 256
    $region25: #{tpu_custom_call.1} parent=1 // pred_fallthru
      _
    // Predicated region
    $region26: #{tpu_custom_call.1} parent=1 // pred_check
      _
    $region27: #{tpu_custom_call.1} parent=1 // pred_check_branch
      %57 = sbr.rel (0) target = $region29
    $region28: #{tpu_custom_call.1} parent=1 // pred_region
      %58 = dma.done [#allocation6], 4096
    $region29: #{tpu_custom_call.1} parent=1 // pred_fallthru
      _
    %v59 = vld [vmem:[#allocation5] sm:$0xff]
    %v60 = vld [vmem:[#allocation5 + $0x8] sm:$0xff]
    %v61 = vld [vmem:[#allocation7] sm:$0xff]
    %v62 = vld [vmem:[#allocation7 + $0x8] sm:$0xff]
    %v63 = vld [vmem:[#allocation7 + $0x10] sm:$0xff]
    %v64 = vld [vmem:[#allocation7 + $0x18] sm:$0xff]
    %v65 = vld [vmem:[#allocation7 + $0x20] sm:$0xff]
    %v66 = vld [vmem:[#allocation7 + $0x28] sm:$0xff]
    %v67 = vld [vmem:[#allocation7 + $0x30] sm:$0xff]
    %v68 = vld [vmem:[#allocation7 + $0x38] sm:$0xff]
    %v69 = vld [vmem:[#allocation7 + $0x40] sm:$0xff]
    %v70 = vld [vmem:[#allocation7 + $0x48] sm:$0xff]
    %v71 = vld [vmem:[#allocation7 + $0x50] sm:$0xff]
    %v72 = vld [vmem:[#allocation7 + $0x58] sm:$0xff]
    %v73 = vld [vmem:[#allocation7 + $0x60] sm:$0xff]
    %v74 = vld [vmem:[#allocation7 + $0x68] sm:$0xff]
    %v75 = vld [vmem:[#allocation7 + $0x70] sm:$0xff]
    %v76 = vld [vmem:[#allocation7 + $0x78] sm:$0xff]
    %v77 = vld [vmem:[#allocation7 + $0x80] sm:$0xff]
    %v78 = vld [vmem:[#allocation7 + $0x88] sm:$0xff]
    %v79 = vld [vmem:[#allocation7 + $0x90] sm:$0xff]
    %v80 = vld [vmem:[#allocation7 + $0x98] sm:$0xff]
    %v81 = vld [vmem:[#allocation7 + $0xa0] sm:$0xff]
    %v82 = vld [vmem:[#allocation7 + $0xa8] sm:$0xff]
    %v83 = vld [vmem:[#allocation7 + $0xb0] sm:$0xff]
    %v84 = vld [vmem:[#allocation7 + $0xb8] sm:$0xff]
    %v85 = vld [vmem:[#allocation7 + $0xc0] sm:$0xff]
    %v86 = vld [vmem:[#allocation7 + $0xc8] sm:$0xff]
    %v87 = vld [vmem:[#allocation7 + $0xd0] sm:$0xff]
    %v88 = vld [vmem:[#allocation7 + $0xd8] sm:$0xff]
    %v89 = vld [vmem:[#allocation7 + $0xe0] sm:$0xff]
    %v90 = vld [vmem:[#allocation7 + $0xe8] sm:$0xff]
    %v91 = vld [vmem:[#allocation7 + $0xf0] sm:$0xff]
    %v92 = vld [vmem:[#allocation7 + $0xf8] sm:$0xff]
    %v93 = vld [vmem:[%s3] sm:$0x3]
    %v95 = vlaneseq
    %v96 = vshrl.u32 %v95, 7
    %v97 = vsub.s32 0, %v96
    %v98 = vrot.slane %v93, %v97
    %v99 = vlaneseq
    %v100 = vshrl.u32 %v99, 7
    %v101 = vsub.s32 1, %v100
    %v102 = vrot.slane %v93, %v101
    %v107 = vunpack.c.l.b16 %v59
    %v108 = vunpack.c.h.b16 %v59
    %v109 = vunpack.c.l.b16 %v60
    %v110 = vunpack.c.h.b16 %v60
    %v111 = vpack.c.b16 %v109, %v107
    %v112 = vpack.c.b16 %v110, %v108
    %v147 = vunpack.c.l.b16 %v61
    %v148 = vunpack.c.h.b16 %v61
    %v149 = vunpack.c.l.b16 %v62
    %v150 = vunpack.c.h.b16 %v62
    %v151 = vunpack.c.l.b16 %v63
    %v152 = vunpack.c.h.b16 %v63
    %v153 = vunpack.c.l.b16 %v64
    %v154 = vunpack.c.h.b16 %v64
    %v155 = vunpack.c.l.b16 %v65
    %v156 = vunpack.c.h.b16 %v65
    %v157 = vunpack.c.l.b16 %v66
    %v158 = vunpack.c.h.b16 %v66
    %v159 = vunpack.c.l.b16 %v67
    %v160 = vunpack.c.h.b16 %v67
    %v161 = vunpack.c.l.b16 %v68
    %v162 = vunpack.c.h.b16 %v68
    %v163 = vunpack.c.l.b16 %v69
    %v164 = vunpack.c.h.b16 %v69
    %v165 = vunpack.c.l.b16 %v70
    %v166 = vunpack.c.h.b16 %v70
    %v167 = vunpack.c.l.b16 %v71
    %v168 = vunpack.c.h.b16 %v71
    %v169 = vunpack.c.l.b16 %v72
    %v170 = vunpack.c.h.b16 %v72
    %v171 = vunpack.c.l.b16 %v73
    %v172 = vunpack.c.h.b16 %v73
    %v173 = vunpack.c.l.b16 %v74
    %v174 = vunpack.c.h.b16 %v74
    %v175 = vunpack.c.l.b16 %v75
    %v176 = vunpack.c.h.b16 %v75
    %v177 = vunpack.c.l.b16 %v76
    %v178 = vunpack.c.h.b16 %v76
    %v179 = vunpack.c.l.b16 %v77
    %v180 = vunpack.c.h.b16 %v77
    %v181 = vunpack.c.l.b16 %v78
    %v182 = vunpack.c.h.b16 %v78
    %v183 = vunpack.c.l.b16 %v79
    %v184 = vunpack.c.h.b16 %v79
    %v185 = vunpack.c.l.b16 %v80
    %v186 = vunpack.c.h.b16 %v80
    %v187 = vunpack.c.l.b16 %v81
    %v188 = vunpack.c.h.b16 %v81
    %v189 = vunpack.c.l.b16 %v82
    %v190 = vunpack.c.h.b16 %v82
    %v191 = vunpack.c.l.b16 %v83
    %v192 = vunpack.c.h.b16 %v83
    %v193 = vunpack.c.l.b16 %v84
    %v194 = vunpack.c.h.b16 %v84
    %v195 = vunpack.c.l.b16 %v85
    %v196 = vunpack.c.h.b16 %v85
    %v197 = vunpack.c.l.b16 %v86
    %v198 = vunpack.c.h.b16 %v86
    %v199 = vunpack.c.l.b16 %v87
    %v200 = vunpack.c.h.b16 %v87
    %v201 = vunpack.c.l.b16 %v88
    %v202 = vunpack.c.h.b16 %v88
    %v203 = vunpack.c.l.b16 %v89
    %v204 = vunpack.c.h.b16 %v89
    %v205 = vunpack.c.l.b16 %v90
    %v206 = vunpack.c.h.b16 %v90
    %v207 = vunpack.c.l.b16 %v91
    %v208 = vunpack.c.h.b16 %v91
    %v209 = vunpack.c.l.b16 %v92
    %v210 = vunpack.c.h.b16 %v92
    %v211 = vpack.c.b16 %v149, %v147
    %v212 = vpack.c.b16 %v150, %v148
    %v213 = vpack.c.b16 %v153, %v151
    %v214 = vpack.c.b16 %v154, %v152
    %v215 = vpack.c.b16 %v157, %v155
    %v216 = vpack.c.b16 %v158, %v156
    %v217 = vpack.c.b16 %v161, %v159
    %v218 = vpack.c.b16 %v162, %v160
    %v219 = vpack.c.b16 %v165, %v163
    %v220 = vpack.c.b16 %v166, %v164
    %v221 = vpack.c.b16 %v169, %v167
    %v222 = vpack.c.b16 %v170, %v168
    %v223 = vpack.c.b16 %v173, %v171
    %v224 = vpack.c.b16 %v174, %v172
    %v225 = vpack.c.b16 %v177, %v175
    %v226 = vpack.c.b16 %v178, %v176
    %v227 = vpack.c.b16 %v181, %v179
    %v228 = vpack.c.b16 %v182, %v180
    %v229 = vpack.c.b16 %v185, %v183
    %v230 = vpack.c.b16 %v186, %v184
    %v231 = vpack.c.b16 %v189, %v187
    %v232 = vpack.c.b16 %v190, %v188
    %v233 = vpack.c.b16 %v193, %v191
    %v234 = vpack.c.b16 %v194, %v192
    %v235 = vpack.c.b16 %v197, %v195
    %v236 = vpack.c.b16 %v198, %v196
    %v237 = vpack.c.b16 %v201, %v199
    %v238 = vpack.c.b16 %v202, %v200
    %v239 = vpack.c.b16 %v205, %v203
    %v240 = vpack.c.b16 %v206, %v204
    %v241 = vpack.c.b16 %v209, %v207
    %v242 = vpack.c.b16 %v210, %v208
    %275 = vmatprep.subr.bf16.mxu0 %v226
    %276 = vmatpush1.bf16.msra.mxu0 %v225
    %277 = vmatprep.subr.bf16.mxu0 %v224
    %278 = vmatpush1.bf16.msra.mxu0 %v223
    %279 = vmatprep.subr.bf16.mxu0 %v222
    %280 = vmatpush1.bf16.msra.mxu0 %v221
    %281 = vmatprep.subr.bf16.mxu0 %v220
    %282 = vmatpush1.bf16.msra.mxu0 %v219
    %283 = vmatprep.subr.bf16.mxu0 %v218
    %284 = vmatpush1.bf16.msra.mxu0 %v217
    %285 = vmatprep.subr.bf16.mxu0 %v216
    %286 = vmatpush1.bf16.msra.mxu0 %v215
    %287 = vmatprep.subr.bf16.mxu0 %v214
    %288 = vmatpush1.bf16.msra.mxu0 %v213
    %289 = vmatprep.subr.bf16.mxu0 %v212
    %290 = vmatpush1.bf16.msra.mxu0 %v211
    %291 = vmatprep.subr.bf16.mxu0 %v242
    %292 = vmatpush2.bf16.msra.mxu0 %v241
    %293 = vmatprep.subr.bf16.mxu0 %v240
    %294 = vmatpush2.bf16.msra.mxu0 %v239
    %295 = vmatprep.subr.bf16.mxu0 %v238
    %296 = vmatpush2.bf16.msra.mxu0 %v237
    %297 = vmatprep.subr.bf16.mxu0 %v236
    %298 = vmatpush2.bf16.msra.mxu0 %v235
    %299 = vmatprep.subr.bf16.mxu0 %v234
    %300 = vmatpush2.bf16.msra.mxu0 %v233
    %301 = vmatprep.subr.bf16.mxu0 %v232
    %302 = vmatpush2.bf16.msra.mxu0 %v231
    %303 = vmatprep.subr.bf16.mxu0 %v230
    %304 = vmatpush2.bf16.msra.mxu0 %v229
    %305 = vmatprep.subr.bf16.mxu0 %v228
    %306 = vmatpush2.bf16.msra.mxu0 %v227
    %307 = vmatprep.mubr.bf16.mxu0 %v112
    %308 = vmatmul.mubr.bf16.gmra.mxu0 %v111
    %v309 = vpop.f32.mrf.mxu0
    %v310 = vadd.f32 %v98, %v309
    %v311 = vpop.f32.mrf.mxu0
    %v312 = vadd.f32 %v102, %v311
    %v313 = vpop.f32.mrf.mxu0
    %v314 = vadd.f32 %v98, %v313
    %v315 = vpop.f32.mrf.mxu0
    %v316 = vadd.f32 %v102, %v315
    %317 = vdwg.mxu0
    %v318 = vld [vmem:[#allocation2] sm:$0xff]
    %v319 = vld [vmem:[#allocation2 + $0x8] sm:$0xff]
    %v320 = vld [vmem:[#allocation2 + $0x10] sm:$0xff]
    %v321 = vld [vmem:[#allocation2 + $0x18] sm:$0xff]
    %v322 = vxor.u32 %v310, 2147483648
    %v323 = vxor.u32 %v312, 2147483648
    %v324 = vxor.u32 %v314, 2147483648
    %v325 = vxor.u32 %v316, 2147483648
    %v326 = vmul.f32 %v322, 1.442695
    %v327 = vpow.pop %v326
    %v328 = vmul.f32 %v323, 1.442695
    %v329 = vpow.pop %v328
    %v330 = vmul.f32 %v324, 1.442695
    %v331 = vpow.pop %v330
    %v332 = vmul.f32 %v325, 1.442695
    %v333 = vpow.pop %v332
    %v334 = vadd.f32 %v327, 1.0
    %v335 = vadd.f32 %v329, 1.0
    %v336 = vadd.f32 %v331, 1.0
    %v337 = vadd.f32 %v333, 1.0
    %v338 = vrcp.pop %v334
    %v339 = vmul.f32 1.0, %v338
    %v340 = vrcp.pop %v335
    %v341 = vmul.f32 1.0, %v340
    %v342 = vrcp.pop %v336
    %v343 = vmul.f32 1.0, %v342
    %v344 = vrcp.pop %v337
    %v345 = vmul.f32 1.0, %v344
    %v346 = vmul.f32 %v318, %v339
    %v347 = vmul.f32 %v319, %v341
    %v348 = vmul.f32 %v320, %v343
    %v349 = vmul.f32 %v321, %v345
    %350 = vst [vmem:[#allocation8] sm:$0xff] %v346
    %351 = vst [vmem:[#allocation8 + $0x8] sm:$0xff] %v347
    %352 = vst [vmem:[#allocation8 + $0x10] sm:$0xff] %v348
    %353 = vst [vmem:[#allocation8 + $0x18] sm:$0xff] %v349
    // Predicated region
    $region30: #{tpu_custom_call.1} parent=1 // pred_check
      _
    $region31: #{tpu_custom_call.1} parent=1 // pred_check_branch
      %355 = sbr.rel (0) target = $region33
    $region32: #{tpu_custom_call.1} parent=1 // pred_region
      %s357 = ssub.s32 512, 512
      %358 = vsyncadd [#allocation4], %s357
      %s359 = sshll.u32 [#allocation8], 4
      %s360 = int_to_ptr.vmem [resolvable:$true] %s359
      %365 = dma.vmem_to_hbm [thread:$0]  %s360, 512, %s4, [#allocation4], 256, 256, 16
    $region33: #{tpu_custom_call.1} parent=1 // pred_fallthru
      _
    // Predicated region
    $region34: #{tpu_custom_call.1} parent=1 // pred_check
      _
    $region35: #{tpu_custom_call.1} parent=1 // pred_check_branch
      %367 = sbr.rel (0) target = $region37
    $region36: #{tpu_custom_call.1} parent=1 // pred_region
      %368 = dma.done [#allocation4], 512
    $region37: #{tpu_custom_call.1} parent=1 // pred_fallthru
      _
    %369 = vsyncpa [#allocation3], 1
    %370 = vsyncpa [#allocation6], 1
    %371 = vsyncpa [#allocation4], 1

</llo_original>
